<compile_context>
chip_gen: v6e
topology: v6e:2x2x1
jax: 0.10.0
libtpu: 0.0.40
codegen_flags: <defaults>
</compile_context>

<pallas_src>
import jax
import jax.numpy as jnp
from jax.experimental import pallas as pl
from jax.experimental.pallas import tpu as pltpu


# ----------------------------------------------------------------------------- #
# Single-step kernel: gates = g @ W_ih^T + h0 @ W_hh^T + b ; LSTMCell update.
# ----------------------------------------------------------------------------- #
def _lstm_cell_kernel(g_ref, h0_ref, c0_ref, wih_ref, whh_ref, b_ref,
                      h_ref, c_ref):
    H = h_ref.shape[-1]
    gates = (
        jnp.dot(g_ref[...], wih_ref[...], preferred_element_type=jnp.float32)
        + jnp.dot(h0_ref[...].astype(jnp.bfloat16), whh_ref[...],
                  preferred_element_type=jnp.float32)
        + b_ref[...]
    )
    # Full-vreg nonlinearity: tanh on the g-gate lanes, sigmoid elsewhere.
    lane = jax.lax.broadcasted_iota(jnp.int32, gates.shape, 1)
    act = jnp.where((lane >= 2 * H) & (lane < 3 * H),
                    jnp.tanh(gates), jax.nn.sigmoid(gates))
    i_gate = act[:, 0 * H:1 * H]
    f_gate = act[:, 1 * H:2 * H]
    g_gate = act[:, 2 * H:3 * H]
    o_gate = act[:, 3 * H:4 * H]

    c_new = f_gate * c0_ref[...] + i_gate * g_gate
    h_new = o_gate * jnp.tanh(c_new)

    c_ref[...] = c_new.astype(c_ref.dtype)
    h_ref[...] = h_new.astype(h_ref.dtype)


@jax.jit
def lstm_cell_forward(g, h0, c0, w_ih_t, w_hh_t, bias):
    """One LSTMCell step (one-shot use only; multi-step -> lstm_cell_sequence).

    w_ih_t: [in, 4H] bf16, w_hh_t: [H, 4H] bf16 (pre-transposed), bias: [1, 4H] f32.
    """
    B, H = h0.shape
    vmem = pl.BlockSpec(memory_space=pltpu.MemorySpace.VMEM)
    h, c = pl.pallas_call(
        _lstm_cell_kernel,
        out_shape=(
            jax.ShapeDtypeStruct((B, H), jnp.float32),
            jax.ShapeDtypeStruct((B, H), jnp.float32),
        ),
        in_specs=[vmem] * 6,
        out_specs=(vmem, vmem),
        # h0 buffer -> h output, c0 buffer -> c output (only pays off if the
        # caller donates; harmless otherwise).
        input_output_aliases={1: 0, 2: 1},
    )(g.astype(jnp.bfloat16), h0.astype(jnp.float32), c0.astype(jnp.float32),
      w_ih_t, w_hh_t, bias)
    return h, c


# ----------------------------------------------------------------------------- #
# Sequence-fused kernel: no grid, everything resident in VMEM, T-loop in-kernel,
# one big input-projection matmul, one coalesced h_seq writeback.
# ----------------------------------------------------------------------------- #
def _lstm_seq_kernel(g_ref, h0_ref, c0_ref, wih_ref, whh_ref, b_ref,
                     hseq_ref, hT_ref, cT_ref):
    T, B, H = hseq_ref.shape

    # One MXU matmul for all T input projections: [T*B, in] @ [in, 4H].
    # Bias folded in here (broadcast hoisted out of the recurrence).
    x_gates = (
        jnp.dot(g_ref[...], wih_ref[...], preferred_element_type=jnp.float32)
        + b_ref[...]
    )                                        # [T*B, 4H] f32
    whh = whh_ref[...]                       # resident bf16 [H, 4H], hoisted load

    # Hoisted lane mask: tanh on g-gate lanes (2H..3H), sigmoid elsewhere.
    lane = jax.lax.broadcasted_iota(jnp.int32, (B, 4 * H), 1)
    tanh_lanes = (lane >= 2 * H) & (lane < 3 * H)

    h = h0_ref[...]
    c = c0_ref[...]
    # Fully unrolled static loop (T small & static): no per-step grid/DMA
    # overhead, LLO scheduler sees the whole recurrence.
    for t in range(T):
        gates = x_gates[t * B:(t + 1) * B, :] + jnp.dot(
            h.astype(jnp.bfloat16), whh, preferred_element_type=jnp.float32)
        act = jnp.where(tanh_lanes, jnp.tanh(gates), jax.nn.sigmoid(gates))
        c = act[:, 1 * H:2 * H] * c + act[:, 0 * H:1 * H] * act[:, 2 * H:3 * H]
        h = act[:, 3 * H:4 * H] * jnp.tanh(c)
        hseq_ref[t] = h.astype(hseq_ref.dtype)   # store into resident VMEM block

    hT_ref[...] = h.astype(hT_ref.dtype)
    cT_ref[...] = c.astype(cT_ref.dtype)


@jax.jit
def lstm_cell_sequence(g_seq, h0, c0, w_ih_t, w_hh_t, bias):
    """Run the LSTM cell over g_seq [T, B, in] in a single fused pallas_call."""
    T, B, in_size = g_seq.shape
    H = h0.shape[-1]
    # Single tiny wrapper op: fused reshape + bf16 cast of g_seq (no f32 round-trip).
    g2d = g_seq.reshape(T * B, in_size).astype(jnp.bfloat16)
    vmem = pl.BlockSpec(memory_space=pltpu.MemorySpace.VMEM)
    h_seq, hT, cT = pl.pallas_call(
        _lstm_seq_kernel,
        out_shape=(
            jax.ShapeDtypeStruct((T, B, H), jnp.float32),
            jax.ShapeDtypeStruct((B, H), jnp.float32),
            jax.ShapeDtypeStruct((B, H), jnp.float32),
        ),
        in_specs=[vmem] * 6,
        out_specs=(vmem, vmem, vmem),
        # h0 -> hT, c0 -> cT (beneficial when caller donates the carried state).
        input_output_aliases={1: 1, 2: 2},
    )(g2d, h0.astype(jnp.float32), c0.astype(jnp.float32), w_ih_t, w_hh_t, bias)
    return h_seq, hT, cT


# ----------------------------------------------------------------------------- #
# Module
# ----------------------------------------------------------------------------- #
class LocationLSTMCoreNetwork:
    """JAX/Pallas port of the PyTorch module's forward pass."""

    def __init__(self, input_size, hidden_size, glimpse_size, key):
        self.input_size = input_size
        self.hidden_size = hidden_size
        self.glimpse_size = glimpse_size
        k1, k2, k3, k4 = jax.random.split(key, 4)
        bound = 1.0 / (hidden_size ** 0.5)
        H = hidden_size
        # nn.LSTMCell parameter layout (kept in f32 for the reference check).
        self.w_ih = jax.random.uniform(k1, (4 * H, input_size), jnp.float32, -bound, bound)
        self.w_hh = jax.random.uniform(k2, (4 * H, H), jnp.float32, -bound, bound)
        self.b_ih = jax.random.uniform(k3, (4 * H,), jnp.float32, -bound, bound)
        self.b_hh = jax.random.uniform(k4, (4 * H,), jnp.float32, -bound, bound)

        # One-time kernel-friendly parameters: pre-transposed bf16 weights and a
        # folded f32 bias.  No per-call transpose / concat / bias add.
        self.w_ih_t = jnp.asarray(self.w_ih.T, jnp.bfloat16)      # [in, 4H]
        self.w_hh_t = jnp.asarray(self.w_hh.T, jnp.bfloat16)      # [H, 4H]
        self.bias = (self.b_ih + self.b_hh).reshape(1, 4 * H)     # [1, 4H] f32

    def forward(self, g, prev_h):
        h0, c0 = prev_h
        return lstm_cell_forward(g, h0, c0, self.w_ih_t, self.w_hh_t, self.bias)

    def forward_sequence(self, g_seq, prev_h):
        """Run T steps in ONE pallas_call (weights + g_seq resident in VMEM)."""
        h0, c0 = prev_h
        return lstm_cell_sequence(g_seq, h0, c0, self.w_ih_t, self.w_hh_t, self.bias)


# ----------------------------------------------------------------------------- #
# Pure-JAX f32 reference (PyTorch LSTMCell semantics)
# ----------------------------------------------------------------------------- #
def _reference_step(g, h0, c0, w_ih, w_hh, b_ih, b_hh):
    gates = g @ w_ih.T + b_ih + h0 @ w_hh.T + b_hh
    H = h0.shape[-1]
    i = jax.nn.sigmoid(gates[:, 0 * H:1 * H])
    f = jax.nn.sigmoid(gates[:, 1 * H:2 * H])
    gg = jnp.tanh(gates[:, 2 * H:3 * H])
    o = jax.nn.sigmoid(gates[:, 3 * H:4 * H])
    c = f * c0 + i * gg
    h = o * jnp.tanh(c)
    return h, c


if __name__ == "__main__":
    key = jax.random.PRNGKey(0)
    k_mod, k_g, k_h, k_c, k_seq = jax.random.split(key, 5)

    batch = 2
    input_size = 16
    hidden_size = 32
    glimpse_size = 16  # unused in forward()
    seq_len = 8

    net = LocationLSTMCoreNetwork(input_size, hidden_size, glimpse_size, k_mod)

    g = jax.random.normal(k_g, (batch, input_size), jnp.float32)
    h0 = jax.random.normal(k_h, (batch, hidden_size), jnp.float32)
    c0 = jax.random.normal(k_c, (batch, hidden_size), jnp.float32)
    g_seq = jax.random.normal(k_seq, (seq_len, batch, input_size), jnp.float32)

    # References (f32, PyTorch semantics).
    h_ref, c_ref = _reference_step(g, h0, c0, net.w_ih, net.w_hh, net.b_ih, net.b_hh)
    h_r, c_r = h0, c0
    hs_ref = []
    for t in range(seq_len):
        h_r, c_r = _reference_step(g_seq[t], h_r, c_r,
                                   net.w_ih, net.w_hh, net.b_ih, net.b_hh)
        hs_ref.append(h_r)
    hseq_ref = jnp.stack(hs_ref, axis=0)

    # Single-step Pallas forward (module semantics).
    h, c = net.forward(g, (h0, c0))
    jax.block_until_ready((h, c))
    # bf16 matmul inputs -> loosened tolerance vs. f32 reference.
    assert jnp.allclose(h, h_ref, atol=5e-2), "single-step h mismatch"
    assert jnp.allclose(c, c_ref, atol=5e-2), "single-step c mismatch"

    # Sequence-fused Pallas forward (one pallas_call for all timesteps).
    h_seq, hT, cT = net.forward_sequence(g_seq, (h0, c0))
    jax.block_until_ready((h_seq, hT, cT))
    assert jnp.allclose(h_seq, hseq_ref, atol=1e-1), "sequence h mismatch"
    assert jnp.allclose(hT, h_r, atol=1e-1), "final h mismatch"
    assert jnp.allclose(cT, c_r, atol=1e-1), "final c mismatch"

    print("KERNEL_OK")
</pallas_src>

<mosaic_0001>
module attributes {stable_mosaic.version = 11 : i64} {
  func.func @_lstm_cell_kernel(%arg0: memref<2x16xbf16, #tpu.memory_space<vmem>>, %arg1: memref<2x32xf32, #tpu.memory_space<vmem>>, %arg2: memref<2x32xf32, #tpu.memory_space<vmem>>, %arg3: memref<16x128xbf16, #tpu.memory_space<vmem>>, %arg4: memref<32x128xbf16, #tpu.memory_space<vmem>>, %arg5: memref<1x128xf32, #tpu.memory_space<vmem>>, %arg6: memref<2x32xf32, #tpu.memory_space<vmem>>, %arg7: memref<2x32xf32, #tpu.memory_space<vmem>>) attributes {dimension_semantics = [], scalar_prefetch = 0 : i64, scratch_operands = 0 : i64, tpu.core_type = #tpu.core_type<tc>} {
    %c0 = arith.constant 0 : index
    %c0_0 = arith.constant 0 : index
    %0 = vector.load %arg0[%c0, %c0_0] : memref<2x16xbf16, #tpu.memory_space<vmem>>, vector<2x16xbf16>
    %c0_1 = arith.constant 0 : index
    %c0_2 = arith.constant 0 : index
    %1 = vector.load %arg3[%c0_1, %c0_2] : memref<16x128xbf16, #tpu.memory_space<vmem>>, vector<16x128xbf16>
    %cst = arith.constant dense<0.000000e+00> : vector<2x128xf32>
    %2 = tpu.matmul %0, %1, %cst {dimension_numbers = #tpu.dot_dimension_numbers<[1], [0], [0], [1], [0, 0, 1, 1], [], []>} : vector<2x16xbf16>, vector<16x128xbf16>, vector<2x128xf32> -> vector<2x128xf32>
    %c0_3 = arith.constant 0 : index
    %c0_4 = arith.constant 0 : index
    %3 = vector.load %arg1[%c0_3, %c0_4] : memref<2x32xf32, #tpu.memory_space<vmem>>, vector<2x32xf32>
    %4 = arith.truncf %3 : vector<2x32xf32> to vector<2x32xbf16>
    %c0_5 = arith.constant 0 : index
    %c0_6 = arith.constant 0 : index
    %5 = vector.load %arg4[%c0_5, %c0_6] : memref<32x128xbf16, #tpu.memory_space<vmem>>, vector<32x128xbf16>
    %cst_7 = arith.constant dense<0.000000e+00> : vector<2x128xf32>
    %6 = tpu.matmul %4, %5, %cst_7 {dimension_numbers = #tpu.dot_dimension_numbers<[1], [0], [0], [1], [0, 0, 1, 1], [], []>} : vector<2x32xbf16>, vector<32x128xbf16>, vector<2x128xf32> -> vector<2x128xf32>
    %7 = arith.addf %2, %6 : vector<2x128xf32>
    %c0_8 = arith.constant 0 : index
    %c0_9 = arith.constant 0 : index
    %8 = vector.load %arg5[%c0_8, %c0_9] : memref<1x128xf32, #tpu.memory_space<vmem>>, vector<1x128xf32>
    %9 = vector.broadcast %8 : vector<1x128xf32> to vector<2x128xf32>
    %10 = arith.addf %7, %9 : vector<2x128xf32>
    %11 = tpu.iota {dimensions = array<i32: 1>} : vector<2x128xi32>
    %c64_i32 = arith.constant 64 : i32
    %12 = vector.broadcast %c64_i32 : i32 to vector<2x128xi32>
    %13 = arith.cmpi sge, %11, %12 : vector<2x128xi32>
    %c96_i32 = arith.constant 96 : i32
    %14 = vector.broadcast %c96_i32 : i32 to vector<2x128xi32>
    %15 = arith.cmpi slt, %11, %14 : vector<2x128xi32>
    %16 = arith.andi %13, %15 : vector<2x128xi1>
    %17 = math.tanh %10 : vector<2x128xf32>
    %18 = arith.negf %10 : vector<2x128xf32>
    %19 = math.exp %18 : vector<2x128xf32>
    %cst_10 = arith.constant 1.000000e+00 : f32
    %20 = vector.broadcast %cst_10 : f32 to vector<2x128xf32>
    %21 = arith.addf %20, %19 : vector<2x128xf32>
    %22 = arith.divf %20, %21 : vector<2x128xf32>
    %23 = arith.select %16, %17, %22 : vector<2x128xi1>, vector<2x128xf32>
    %24 = vector.extract_strided_slice %23 {offsets = [0, 0], sizes = [2, 32], strides = [1, 1]} : vector<2x128xf32> to vector<2x32xf32>
    %25 = vector.extract_strided_slice %23 {offsets = [0, 32], sizes = [2, 32], strides = [1, 1]} : vector<2x128xf32> to vector<2x32xf32>
    %26 = vector.extract_strided_slice %23 {offsets = [0, 64], sizes = [2, 32], strides = [1, 1]} : vector<2x128xf32> to vector<2x32xf32>
    %27 = vector.extract_strided_slice %23 {offsets = [0, 96], sizes = [2, 32], strides = [1, 1]} : vector<2x128xf32> to vector<2x32xf32>
    %c0_11 = arith.constant 0 : index
    %c0_12 = arith.constant 0 : index
    %28 = vector.load %arg2[%c0_11, %c0_12] : memref<2x32xf32, #tpu.memory_space<vmem>>, vector<2x32xf32>
    %29 = arith.mulf %25, %28 : vector<2x32xf32>
    %30 = arith.mulf %24, %26 : vector<2x32xf32>
    %31 = arith.addf %29, %30 : vector<2x32xf32>
    %32 = math.tanh %31 : vector<2x32xf32>
    %33 = arith.mulf %27, %32 : vector<2x32xf32>
    %c0_13 = arith.constant 0 : index
    %c0_14 = arith.constant 0 : index
    %34 = vector.load %arg7[%c0_13, %c0_14] : memref<2x32xf32, #tpu.memory_space<vmem>>, vector<2x32xf32>
    tpu.vector_store %arg7[%c0_13, %c0_14], %31 {strides = array<i32>} : memref<2x32xf32, #tpu.memory_space<vmem>>, vector<2x32xf32>,
    %c0_15 = arith.constant 0 : index
    %c0_16 = arith.constant 0 : index
    %35 = vector.load %arg6[%c0_15, %c0_16] : memref<2x32xf32, #tpu.memory_space<vmem>>, vector<2x32xf32>
    tpu.vector_store %arg6[%c0_15, %c0_16], %33 {strides = array<i32>} : memref<2x32xf32, #tpu.memory_space<vmem>>, vector<2x32xf32>,
    return
  }
}

</mosaic_0001>

<llo_original>
// kernel: lstm_cell_forward.1
$region0: #{lstm_cell_forward.1}
  #allocation0 [shape = 'u32[]', space=smem, size = 0x4, offset = 0x4, fixed_abs, tag = 'smem constant byte address 0x4 - core index']
  #allocation1 [shape = 'u32[144,128]{1,0:T(1,128)}', space=vmem, size = 0x12000, scoped, tag = 'internal scratch']
  %s0 = inlined_call_operand.vmem [shape: bf16[2,16], index: 0, kind: input, shape index: {}]
  %s1 = inlined_call_operand.hbm [shape: f32[2,32], index: 1, kind: input, shape index: {}, may-alias: {1,6}]
  %s2 = inlined_call_operand.hbm [shape: f32[2,32], index: 2, kind: input, shape index: {}, may-alias: {2,7}]
  %s3 = inlined_call_operand.vmem [shape: bf16[16,128], index: 3, kind: input, shape index: {}]
  %s4 = inlined_call_operand.hbm [shape: bf16[32,128], index: 4, kind: input, shape index: {}]
  %s5 = inlined_call_operand.vmem [shape: f32[1,128], index: 5, kind: input, shape index: {}]
  %s6 = inlined_call_operand.hbm [shape: f32[2,32], index: 6, kind: output, shape index: {0}, may-alias: {1,6}]
  %s7 = inlined_call_operand.hbm [shape: f32[2,32], index: 7, kind: output, shape index: {1}, may-alias: {2,7}]
  %8 = xla_tuple %s6, %s7
  %s9 = sld [smem:[#allocation0]]
  $region54: #{lstm_cell_forward.1} parent=0
    _
  %s11 = ssub.s32 1, %s9
  %s12 = scalar_select 0, %s11, %s9
  $region1: #{lstm_cell_forward.1} parent=0
    #allocation2 [shape = 'u8[1024]{0}', space=vmem, size = 0x400, scoped, tag = 'input window, operand 1, single buffered']
    #allocation3 [shape = 's32[1]{0}', space=sflag, size = 0x4, scoped, tag = 'scoped memory for lstm_cell_forward.1']
    #allocation4 [shape = 's32[1]{0}', space=sflag, size = 0x4, scoped, tag = 'scoped memory for lstm_cell_forward.1']
    #allocation5 [shape = 'u8[1024]{0}', space=vmem, size = 0x400, scoped, tag = 'input window, operand 2, single buffered']
    #allocation6 [shape = 's32[1]{0}', space=sflag, size = 0x4, scoped, tag = 'scoped memory for lstm_cell_forward.1']
    #allocation7 [shape = 'u8[8192]{0}', space=vmem, size = 0x2000, scoped, tag = 'input window, operand 4, single buffered']
    #allocation8 [shape = 'u8[1024]{0}', space=vmem, size = 0x400, scoped, tag = 'output window, operand 0, single buffered']
    #allocation9 [shape = 'u8[1024]{0}', space=vmem, size = 0x400, scoped, tag = 'output window, operand 1, single buffered']
    #allocation10 [shape = 's32[1]{0}', space=sflag, size = 0x4, scoped, tag = 'scoped memory for lstm_cell_forward.1']
    %13 = vsyncpa [#allocation3], 0
    %14 = vsyncpa [#allocation6], 0
    %15 = vsyncpa [#allocation4], 0
    %16 = vsyncpa [#allocation10], 0
    // Predicated region
    $region2: #{lstm_cell_forward.1} parent=1 // pred_check
      _
    $region3: #{lstm_cell_forward.1} parent=1 // pred_check_branch
      %18 = sbr.rel (0) target = $region5
    $region4: #{lstm_cell_forward.1} parent=1 // pred_region
      _
    $region5: #{lstm_cell_forward.1} parent=1 // pred_fallthru
      _
    // Predicated region
    $region6: #{lstm_cell_forward.1} parent=1 // pred_check
      _
    $region7: #{lstm_cell_forward.1} parent=1 // pred_check_branch
      %20 = sbr.rel (0) target = $region9
    $region8: #{lstm_cell_forward.1} parent=1 // pred_region
      %s22 = ssub.s32 32, 32
      %23 = vsyncadd [#allocation3], %s22
      %s25 = sshll.u32 [#allocation2], 4
      %s26 = int_to_ptr.vmem [resolvable:$true] %s25
      %28 = dma.hbm_to_vmem [thread:$0]  %s1, 32, %s26, [#allocation3]
    $region9: #{lstm_cell_forward.1} parent=1 // pred_fallthru
      _
    // Predicated region
    $region10: #{lstm_cell_forward.1} parent=1 // pred_check
      _
    $region11: #{lstm_cell_forward.1} parent=1 // pred_check_branch
      %30 = sbr.rel (0) target = $region13
    $region12: #{lstm_cell_forward.1} parent=1 // pred_region
      %s32 = ssub.s32 32, 32
      %33 = vsyncadd [#allocation6], %s32
      %s35 = sshll.u32 [#allocation5], 4
      %s36 = int_to_ptr.vmem [resolvable:$true] %s35
      %38 = dma.hbm_to_vmem [thread:$0]  %s2, 32, %s36, [#allocation6]
    $region13: #{lstm_cell_forward.1} parent=1 // pred_fallthru
      _
    // Predicated region
    $region14: #{lstm_cell_forward.1} parent=1 // pred_check
      _
    $region15: #{lstm_cell_forward.1} parent=1 // pred_check_branch
      %40 = sbr.rel (0) target = $region17
    $region16: #{lstm_cell_forward.1} parent=1 // pred_region
      _
    $region17: #{lstm_cell_forward.1} parent=1 // pred_fallthru
      _
    // Predicated region
    $region18: #{lstm_cell_forward.1} parent=1 // pred_check
      _
    $region19: #{lstm_cell_forward.1} parent=1 // pred_check_branch
      %42 = sbr.rel (0) target = $region21
    $region20: #{lstm_cell_forward.1} parent=1 // pred_region
      %s44 = ssub.s32 256, 256
      %45 = vsyncadd [#allocation6], %s44
      %s46 = sshll.u32 [#allocation7], 4
      %s47 = int_to_ptr.vmem [resolvable:$true] %s46
      %52 = dma.hbm_to_vmem [thread:$0]  %s4, 256, %s47, [#allocation6], 64, 64, 4
    $region21: #{lstm_cell_forward.1} parent=1 // pred_fallthru
      _
    // Predicated region
    $region22: #{lstm_cell_forward.1} parent=1 // pred_check
      _
    $region23: #{lstm_cell_forward.1} parent=1 // pred_check_branch
      %54 = sbr.rel (0) target = $region25
    $region24: #{lstm_cell_forward.1} parent=1 // pred_region
      _
    $region25: #{lstm_cell_forward.1} parent=1 // pred_fallthru
      _
    // Predicated region
    $region26: #{lstm_cell_forward.1} parent=1 // pred_check
      _
    $region27: #{lstm_cell_forward.1} parent=1 // pred_check_branch
      %56 = sbr.rel (0) target = $region29
    $region28: #{lstm_cell_forward.1} parent=1 // pred_region
      %57 = dma.done [#allocation3], 32
    $region29: #{lstm_cell_forward.1} parent=1 // pred_fallthru
      _
    // Predicated region
    $region30: #{lstm_cell_forward.1} parent=1 // pred_check
      _
    $region31: #{lstm_cell_forward.1} parent=1 // pred_check_branch
      %59 = sbr.rel (0) target = $region33
    $region32: #{lstm_cell_forward.1} parent=1 // pred_region
      %60 = dma.done [#allocation6], 32
    $region33: #{lstm_cell_forward.1} parent=1 // pred_fallthru
      _
    // Predicated region
    $region34: #{lstm_cell_forward.1} parent=1 // pred_check
      _
    $region35: #{lstm_cell_forward.1} parent=1 // pred_check_branch
      %62 = sbr.rel (0) target = $region37
    $region36: #{lstm_cell_forward.1} parent=1 // pred_region
      %63 = dma.done [#allocation6], 256
    $region37: #{lstm_cell_forward.1} parent=1 // pred_fallthru
      _
    %v65 = vld [vmem:[%s0] sm:$0x1]
    %v66 = vld [vmem:[%s3] sm:$0xf]
    %v67 = vld [vmem:[%s3 + $0x4] sm:$0xf]
    %v68 = vld [vmem:[#allocation2] sm:$0x3]
    %v69 = vpack.c.bf16 %v68, %v68
    %v70 = vld [vmem:[#allocation7] sm:$0xf]
    %v71 = vld [vmem:[#allocation7 + $0x4] sm:$0xf]
    %v72 = vld [vmem:[#allocation7 + $0x8] sm:$0xf]
    %v73 = vld [vmem:[#allocation7 + $0xc] sm:$0xf]
    %v78 = vunpack.c.l.b16 %v70
    %v79 = vunpack.c.l.b16 %v71
    %v80 = vunpack.c.l.b16 %v72
    %v81 = vunpack.c.l.b16 %v73
    %v82 = vpack.c.b16 %v79, %v78
    %v83 = vpack.c.b16 %v81, %v80
    %vm86 = vcmask 261120
    %v88 = vsel %vm86, %v69, 0
    %90 = vmatprep.subr.bf16.mxu0 0
    %91 = vmatpush1.bf16.msra.mxu0 0
    %92 = vmatprep.subr.bf16.mxu0 0
    %93 = vmatpush1.bf16.msra.mxu0 0
    %94 = vmatprep.subr.bf16.mxu0 0
    %95 = vmatpush1.bf16.msra.mxu0 0
    %96 = vmatprep.subr.bf16.mxu0 0
    %97 = vmatpush1.bf16.msra.mxu0 0
    %98 = vmatprep.subr.bf16.mxu0 0
    %99 = vmatpush1.bf16.msra.mxu0 0
    %100 = vmatprep.subr.bf16.mxu0 0
    %101 = vmatpush1.bf16.msra.mxu0 0
    %102 = vmatprep.subr.bf16.mxu0 0
    %103 = vmatpush1.bf16.msra.mxu0 %v83
    %104 = vmatprep.subr.bf16.mxu0 0
    %105 = vmatpush1.bf16.msra.mxu0 %v82
    %106 = vmatprep.subr.bf16.mxu0 0
    %107 = vmatpush2.bf16.msra.mxu0 0
    %108 = vmatprep.subr.bf16.mxu0 0
    %109 = vmatpush2.bf16.msra.mxu0 0
    %110 = vmatprep.subr.bf16.mxu0 0
    %111 = vmatpush2.bf16.msra.mxu0 0
    %112 = vmatprep.subr.bf16.mxu0 0
    %113 = vmatpush2.bf16.msra.mxu0 0
    %114 = vmatprep.subr.bf16.mxu0 0
    %115 = vmatpush2.bf16.msra.mxu0 0
    %116 = vmatprep.subr.bf16.mxu0 0
    %117 = vmatpush2.bf16.msra.mxu0 0
    %118 = vmatprep.subr.bf16.mxu0 0
    %119 = vmatpush2.bf16.msra.mxu0 0
    %120 = vmatprep.subr.bf16.mxu0 0
    %121 = vmatpush2.bf16.msra.mxu0 0
    %122 = vmatprep.mubr.bf16.mxu0 0
    %123 = vmatmul.mubr.bf16.gmra.mxu0 %v88
    %v124 = vpop.f32.mrf.mxu0
    %v125 = vadd.f32 0.0, %v124
    %v126 = vpop.f32.mrf.mxu0
    %v127 = vpop.f32.mrf.mxu0
    %v128 = vpop.f32.mrf.mxu0
    %129 = vdwg.mxu0
    %v132 = vunpack.c.l.b16 %v66
    %v133 = vunpack.c.l.b16 %v67
    %v134 = vpack.c.b16 %v133, %v132
    %vm136 = vcmask 130048
    %v138 = vsel %vm136, %v65, 0
    %140 = vmatprep.subr.bf16.mxu0 0
    %141 = vmatpush1.bf16.msra.mxu0 0
    %142 = vmatprep.subr.bf16.mxu0 0
    %143 = vmatpush1.bf16.msra.mxu0 0
    %144 = vmatprep.subr.bf16.mxu0 0
    %145 = vmatpush1.bf16.msra.mxu0 0
    %146 = vmatprep.subr.bf16.mxu0 0
    %147 = vmatpush1.bf16.msra.mxu0 0
    %148 = vmatprep.subr.bf16.mxu0 0
    %149 = vmatpush1.bf16.msra.mxu0 0
    %150 = vmatprep.subr.bf16.mxu0 0
    %151 = vmatpush1.bf16.msra.mxu0 0
    %152 = vmatprep.subr.bf16.mxu0 0
    %153 = vmatpush1.bf16.msra.mxu0 0
    %154 = vmatprep.subr.bf16.mxu0 0
    %155 = vmatpush1.bf16.msra.mxu0 %v134
    %156 = vmatprep.subr.bf16.mxu0 0
    %157 = vmatpush2.bf16.msra.mxu0 0
    %158 = vmatprep.subr.bf16.mxu0 0
    %159 = vmatpush2.bf16.msra.mxu0 0
    %160 = vmatprep.subr.bf16.mxu0 0
    %161 = vmatpush2.bf16.msra.mxu0 0
    %162 = vmatprep.subr.bf16.mxu0 0
    %163 = vmatpush2.bf16.msra.mxu0 0
    %164 = vmatprep.subr.bf16.mxu0 0
    %165 = vmatpush2.bf16.msra.mxu0 0
    %166 = vmatprep.subr.bf16.mxu0 0
    %167 = vmatpush2.bf16.msra.mxu0 0
    %168 = vmatprep.subr.bf16.mxu0 0
    %169 = vmatpush2.bf16.msra.mxu0 0
    %170 = vmatprep.subr.bf16.mxu0 0
    %171 = vmatpush2.bf16.msra.mxu0 0
    %172 = vmatprep.mubr.bf16.mxu0 0
    %173 = vmatmul.mubr.bf16.gmra.mxu0 %v138
    %v174 = vpop.f32.mrf.mxu0
    %v175 = vadd.f32 %v125, %v174
    %v176 = vpop.f32.mrf.mxu0
    %v177 = vpop.f32.mrf.mxu0
    %v178 = vpop.f32.mrf.mxu0
    %179 = vdwg.mxu0
    %v180 = vld [vmem:[%s5] sm:$0x1]
    %v182 = vlaneseq
    %v183 = vshrl.u32 %v182, 7
    %v184 = vsub.s32 0, %v183
    %v185 = vrot.slane %v180, %v184
    %v187 = vadd.f32 %v175, %v185
    %v188 = vlaneseq
    %v189 = vand.u32 %v188, 127
    %vm190 = vcmp.ge.s32.totalorder %v189, 64
    %vm191 = vcmp.lt.s32.totalorder %v189, 96
    %vm192 = vmand %vm190, %vm191
    %v193 = vtanh.pop %v187
    %v194 = vxor.u32 %v187, 2147483648
    %v195 = vmul.f32 %v194, 1.442695
    %v196 = vpow.pop %v195
    %v197 = vadd.f32 %v196, 1.0
    %v198 = vrcp.pop %v197
    %v199 = vmul.f32 1.0, %v198
    %v200 = vsel %vm192, %v193, %v199
    %v201 = vld [vmem:[#allocation5] sm:$0x3]
    %203 = vrot.lane.b32.xlu0 %v201, 32
    %v204 = vpop.permute.xlu0 %203
    %v206 = vmul.f32 %v200, %v204
    %208 = vrot.lane.b32.xlu0 %v200, 64
    %v209 = vpop.permute.xlu0 %208
    %v211 = vmul.f32 %v200, %v209
    %213 = vrot.lane.b32.xlu0 %v211, 32
    %v214 = vpop.permute.xlu0 %213
    %v216 = vadd.f32 %v206, %v214
    %v217 = vtanh.pop %v216
    %219 = vrot.lane.b32.xlu0 %v217, 64
    %v220 = vpop.permute.xlu0 %219
    %v222 = vmul.f32 %v200, %v220
    %224 = vrot.lane.b32.xlu0 %v216, 96
    %v225 = vpop.permute.xlu0 %224
    %vm227 = vcmask 254976
    %228 = vst.msk [vmem:[#allocation9] sm:$0x3] %vm227, %v225
    %230 = vrot.lane.b32.xlu0 %v222, 32
    %v231 = vpop.permute.xlu0 %230
    %233 = vst.msk [vmem:[#allocation8] sm:$0x3] %vm227, %v231
    // Predicated region
    $region38: #{lstm_cell_forward.1} parent=1 // pred_check
      _
    $region39: #{lstm_cell_forward.1} parent=1 // pred_check_branch
      %235 = sbr.rel (0) target = $region41
    $region40: #{lstm_cell_forward.1} parent=1 // pred_region
      %s237 = ssub.s32 32, 32
      %238 = vsyncadd [#allocation4], %s237
      %s240 = sshll.u32 [#allocation8], 4
      %s241 = int_to_ptr.vmem [resolvable:$true] %s240
      %243 = dma.vmem_to_hbm [thread:$0]  %s241, 32, %s6, [#allocation4]
    $region41: #{lstm_cell_forward.1} parent=1 // pred_fallthru
      _
    // Predicated region
    $region42: #{lstm_cell_forward.1} parent=1 // pred_check
      _
    $region43: #{lstm_cell_forward.1} parent=1 // pred_check_branch
      %245 = sbr.rel (0) target = $region45
    $region44: #{lstm_cell_forward.1} parent=1 // pred_region
      %s247 = ssub.s32 32, 32
      %248 = vsyncadd [#allocation10], %s247
      %s250 = sshll.u32 [#allocation9], 4
      %s251 = int_to_ptr.vmem [resolvable:$true] %s250
      %253 = dma.vmem_to_hbm [thread:$0]  %s251, 32, %s7, [#allocation10]
    $region45: #{lstm_cell_forward.1} parent=1 // pred_fallthru
      _
    // Predicated region
    $region46: #{lstm_cell_forward.1} parent=1 // pred_check
      _
    $region47: #{lstm_cell_forward.1} parent=1 // pred_check_branch
      %255 = sbr.rel (0) target = $region49
    $region48: #{lstm_cell_forward.1} parent=1 // pred_region
      %256 = dma.done [#allocation4], 32
    $region49: #{lstm_cell_forward.1} parent=1 // pred_fallthru
      _
    // Predicated region
    $region50: #{lstm_cell_forward.1} parent=1 // pred_check
      _
    $region51: #{lstm_cell_forward.1} parent=1 // pred_check_branch
      %258 = sbr.rel (0) target = $region53
    $region52: #{lstm_cell_forward.1} parent=1 // pred_region
      %259 = dma.done [#allocation10], 32
    $region53: #{lstm_cell_forward.1} parent=1 // pred_fallthru
      _
    %260 = vsyncpa [#allocation3], 1
    %261 = vsyncpa [#allocation6], 1
    %262 = vsyncpa [#allocation4], 1
    %263 = vsyncpa [#allocation10], 1

</llo_original>
